<compile_context>
chip_gen: v6e
topology: v6e:2x2x1
jax: 0.10.0
libtpu: 0.0.40
codegen_flags: <defaults>
</compile_context>

<pallas_src>
import functools

import jax
import jax.numpy as jnp
from jax.experimental import pallas as pl
from jax.experimental.pallas import tpu as pltpu


# ---------------------------------------------------------------------------
# Kernel
# ---------------------------------------------------------------------------
def _ae_kernel(
    x_ref,                    # (TB, 256) f32  speaker_emb tile (cast to bf16 in-kernel)
    w1_ref, b1_ref,           # inp1: (256, 128) bf16, (1, 128) f32
    wc_ref, b2_ref,           # fused [inp2 | l1(x1-branch)]: (128, 256) bf16, (1, 128) f32
    wl1b_ref, bl1_ref,        # l1 (x2 branch): (128, 128) bf16, (1, 128) f32
    wl2_ref, bl2_ref,         # l2: (128, 128) bf16, (1, 128) f32
    whead_ref, bhead_ref,     # fused heads [out_speak | out_acc(pad)]: (128, 384) bf16, (1, 384) f32
    osp_ref,                  # (TB, 256) bf16  relu(out_speak)
    oacc_ref,                 # (TB, 128) bf16  relu(out_acc), lanes 100:128 are zero-pad
):
    x = x_ref[...].astype(jnp.bfloat16)

    # x1 = relu(inp1(speaker_emb))
    x1 = jnp.maximum(
        jnp.dot(x, w1_ref[...], preferred_element_type=jnp.float32) + b1_ref[...],
        0.0)
    x1b = x1.astype(jnp.bfloat16)

    # Fused N=256 dot: t = x1b @ [W_inp2 | W_l1a]; split at the 128-lane tile
    # boundary (free) into the inp2 pre-activation and the l1 partial sum.
    t = jnp.dot(x1b, wc_ref[...], preferred_element_type=jnp.float32)

    # x2 = relu(inp2(x1))
    x2 = jnp.maximum(t[:, :128] + b2_ref[...], 0.0)
    x2b = x2.astype(jnp.bfloat16)

    # out = relu(l1(cat(x1, x2)))  -- concat folded into split matmuls,
    # the x1 branch already computed inside t[:, 128:].
    h = jnp.maximum(
        t[:, 128:]
        + jnp.dot(x2b, wl1b_ref[...], preferred_element_type=jnp.float32)
        + bl1_ref[...],
        0.0)
    hb = h.astype(jnp.bfloat16)

    # out = relu(l2(out))
    h2 = jnp.maximum(
        jnp.dot(hb, wl2_ref[...], preferred_element_type=jnp.float32) + bl2_ref[...],
        0.0)
    h2b = h2.astype(jnp.bfloat16)

    # Fused heads: [out_speak | out_acc(pad)] then relu; split at lane 256
    # (tile-aligned) into two lane-dense bf16 stores.
    y = jnp.maximum(
        jnp.dot(h2b, whead_ref[...], preferred_element_type=jnp.float32) + bhead_ref[...],
        0.0)
    osp_ref[...] = y[:, :256].astype(jnp.bfloat16)
    oacc_ref[...] = y[:, 256:].astype(jnp.bfloat16)


# ---------------------------------------------------------------------------
# Parameter init (PyTorch nn.Linear default init, stored transposed & padded)
# ---------------------------------------------------------------------------
def _linear_params(key, in_f, out_f):
    """PyTorch nn.Linear default init: U(-1/sqrt(in), 1/sqrt(in)); W stored (in, out)."""
    kw, kb = jax.random.split(key)
    bound = 1.0 / jnp.sqrt(jnp.float32(in_f))
    w = jax.random.uniform(kw, (in_f, out_f), jnp.float32, -bound, bound)
    b = jax.random.uniform(kb, (1, out_f), jnp.float32, -bound, bound)
    return w, b


def _pad_to(a, shape):
    pads = [(0, t - s) for s, t in zip(a.shape, shape)]
    return jnp.pad(a, pads)


def init_autoencoder_params(key):
    keys = jax.random.split(key, 6)
    w1, b1 = _linear_params(keys[0], 256, 100)      # inp1
    w2, b2 = _linear_params(keys[1], 100, 100)      # inp2
    wl1, bl1 = _linear_params(keys[2], 200, 128)    # l1
    wl2, bl2 = _linear_params(keys[3], 128, 128)    # l2
    wacc, bacc = _linear_params(keys[4], 128, 100)  # out_acc
    wsp, bsp = _linear_params(keys[5], 128, 256)    # out_speak

    bf = jnp.bfloat16
    # Zero-pad all 100-wide dims to 128; fuse inp2 with the l1(x1) branch and
    # fuse the two output heads.
    w1_p = _pad_to(w1, (256, 128)).astype(bf)
    b1_p = _pad_to(b1, (1, 128))
    w2_p = _pad_to(w2, (128, 128))
    b2_p = _pad_to(b2, (1, 128))
    wl1a = _pad_to(wl1[:100], (128, 128))           # l1 weight rows for x1
    wl1b = _pad_to(wl1[100:], (128, 128)).astype(bf)  # l1 weight rows for x2
    wc = jnp.concatenate([w2_p, wl1a], axis=1).astype(bf)        # (128, 256)
    wacc_p = _pad_to(wacc, (128, 128))
    bacc_p = _pad_to(bacc, (1, 128))
    whead = jnp.concatenate([wsp, wacc_p], axis=1).astype(bf)    # (128, 384)
    bhead = jnp.concatenate([bsp, bacc_p], axis=1)               # (1, 384)

    return dict(
        w1=w1_p, b1=b1_p,
        wc=wc, b2=b2_p,
        wl1b=wl1b, bl1=bl1,
        wl2=wl2.astype(bf), bl2=bl2,
        whead=whead, bhead=bhead,
    )


# ---------------------------------------------------------------------------
# Wrapper
# ---------------------------------------------------------------------------
def _round_up(x, m):
    return ((x + m - 1) // m) * m


@functools.partial(jax.jit, static_argnames=("tile_b",))
def autoencoder_forward(speaker_emb, acc_emb, params, tile_b=2048):
    # acc_emb is unused by the PyTorch forward; kept for signature parity.
    del acc_emb
    B = speaker_emb.shape[0]

    # Batch tile: large (amortize ~0.35us/step), multiple of 16 (bf16 sublane
    # packing), but no larger than the batch.  When the whole batch fits in a
    # single tile and B >= 512, split into 2 tiles so v7x can use both cores.
    TB = min(tile_b, _round_up(B, 16))
    if B >= 512 and TB >= B:
        TB = pl.cdiv(B, 2)
    TB = _round_up(TB, 16)
    nb = pl.cdiv(B, TB)   # partial tail block handled by Pallas (no jnp.pad)

    def resident(arr):
        # Full-array block, constant index map -> stays VMEM-resident.
        return pl.BlockSpec(arr.shape, lambda i: (0, 0))

    operands = (
        speaker_emb,                       # f32, cast to bf16 inside kernel
        params["w1"], params["b1"],
        params["wc"], params["b2"],
        params["wl1b"], params["bl1"],
        params["wl2"], params["bl2"],
        params["whead"], params["bhead"],
    )
    in_specs = [pl.BlockSpec((TB, 256), lambda i: (i, 0))] + [
        resident(a) for a in operands[1:]
    ]

    out_sp, out_acc = pl.pallas_call(
        _ae_kernel,
        out_shape=(
            jax.ShapeDtypeStruct((B, 256), jnp.bfloat16),
            jax.ShapeDtypeStruct((B, 128), jnp.bfloat16),
        ),
        grid=(nb,),
        in_specs=in_specs,
        out_specs=(
            pl.BlockSpec((TB, 256), lambda i: (i, 0)),
            pl.BlockSpec((TB, 128), lambda i: (i, 0)),
        ),
        compiler_params=pltpu.CompilerParams(
            dimension_semantics=("parallel",),
            vmem_limit_bytes=32 * 1024 * 1024,  # headroom for large TB on v5e
        ),
    )(*operands)

    # speak head is returned as-is (bf16, no extra copies); acc head is
    # un-padded back to 100 features here, outside the kernel.
    mf_sp = out_sp
    mf_acc = out_acc[:, :100]
    return mf_sp, mf_acc


# ---------------------------------------------------------------------------
# Plain-JAX reference (mirrors the kernel's bf16 casts, f32 accumulation)
# ---------------------------------------------------------------------------
def _reference_forward(speaker_emb, params):
    f32 = jnp.float32
    bf = jnp.bfloat16

    def up(a):
        return a.astype(f32)

    x = speaker_emb.astype(bf).astype(f32)
    x1 = jnp.maximum(x @ up(params["w1"]) + params["b1"], 0.0)
    x1b = x1.astype(bf).astype(f32)
    t = x1b @ up(params["wc"])
    x2 = jnp.maximum(t[:, :128] + params["b2"], 0.0)
    x2b = x2.astype(bf).astype(f32)
    h = jnp.maximum(t[:, 128:] + x2b @ up(params["wl1b"]) + params["bl1"], 0.0)
    hb = h.astype(bf).astype(f32)
    h2 = jnp.maximum(hb @ up(params["wl2"]) + params["bl2"], 0.0)
    h2b = h2.astype(bf).astype(f32)
    y = jnp.maximum(h2b @ up(params["whead"]) + params["bhead"], 0.0)
    return y[:, :256], y[:, 256:356]


if __name__ == "__main__":
    key = jax.random.PRNGKey(0)
    k_params, k_x = jax.random.split(key)

    params = init_autoencoder_params(k_params)

    batch = 2
    # speaker_emb: PyTorch script uses (1, 256) zeros; use random (batch, 256).
    speaker_emb = jax.random.normal(k_x, (batch, 256), jnp.float32)
    # acc_emb: (batch, 1, 256) in the PyTorch script; unused by forward.
    acc_emb = jax.random.normal(jax.random.PRNGKey(1), (batch, 1, 256), jnp.float32)

    mf_sp, mf_acc = autoencoder_forward(speaker_emb, acc_emb, params)
    jax.block_until_ready((mf_sp, mf_acc))

    ref_sp, ref_acc = _reference_forward(speaker_emb, params)
    assert mf_sp.shape == (batch, 256) and mf_acc.shape == (batch, 100)
    # Outputs are stored in bf16 (perf feedback); compare in f32 with a
    # tolerance that covers the final bf16 rounding.
    assert jnp.allclose(mf_sp.astype(jnp.float32), ref_sp, atol=2e-2, rtol=2e-2)
    assert jnp.allclose(mf_acc.astype(jnp.float32), ref_acc, atol=2e-2, rtol=2e-2)

    print("KERNEL_OK")
</pallas_src>

<mosaic_0001>
module attributes {stable_mosaic.version = 11 : i64} {
  func.func @_ae_kernel(%arg0: i32, %arg1: memref<16x256xf32, #tpu.memory_space<vmem>>, %arg2: memref<256x128xbf16, #tpu.memory_space<vmem>>, %arg3: memref<1x128xf32, #tpu.memory_space<vmem>>, %arg4: memref<128x256xbf16, #tpu.memory_space<vmem>>, %arg5: memref<1x128xf32, #tpu.memory_space<vmem>>, %arg6: memref<128x128xbf16, #tpu.memory_space<vmem>>, %arg7: memref<1x128xf32, #tpu.memory_space<vmem>>, %arg8: memref<128x128xbf16, #tpu.memory_space<vmem>>, %arg9: memref<1x128xf32, #tpu.memory_space<vmem>>, %arg10: memref<128x384xbf16, #tpu.memory_space<vmem>>, %arg11: memref<1x384xf32, #tpu.memory_space<vmem>>, %arg12: memref<16x256xbf16, #tpu.memory_space<vmem>>, %arg13: memref<16x128xbf16, #tpu.memory_space<vmem>>) attributes {dimension_semantics = [#tpu.dimension_semantics<parallel>], iteration_bounds = array<i64: 1>, scalar_prefetch = 0 : i64, scratch_operands = 0 : i64, tpu.core_type = #tpu.core_type<tc>, window_params = [{transform_indices = @transform_0, window_bounds = array<i64: 16, 256>}, {pipeline_mode = #tpu.pipeline_mode<synchronous>, transform_indices = @transform_1, window_bounds = array<i64: 256, 128>}, {pipeline_mode = #tpu.pipeline_mode<synchronous>, transform_indices = @transform_2, window_bounds = array<i64: 1, 128>}, {pipeline_mode = #tpu.pipeline_mode<synchronous>, transform_indices = @transform_3, window_bounds = array<i64: 128, 256>}, {pipeline_mode = #tpu.pipeline_mode<synchronous>, transform_indices = @transform_4, window_bounds = array<i64: 1, 128>}, {pipeline_mode = #tpu.pipeline_mode<synchronous>, transform_indices = @transform_5, window_bounds = array<i64: 128, 128>}, {pipeline_mode = #tpu.pipeline_mode<synchronous>, transform_indices = @transform_6, window_bounds = array<i64: 1, 128>}, {pipeline_mode = #tpu.pipeline_mode<synchronous>, transform_indices = @transform_7, window_bounds = array<i64: 128, 128>}, {pipeline_mode = #tpu.pipeline_mode<synchronous>, transform_indices = @transform_8, window_bounds = array<i64: 1, 128>}, {pipeline_mode = #tpu.pipeline_mode<synchronous>, transform_indices = @transform_9, window_bounds = array<i64: 128, 384>}, {pipeline_mode = #tpu.pipeline_mode<synchronous>, transform_indices = @transform_10, window_bounds = array<i64: 1, 384>}, {transform_indices = @transform_11, window_bounds = array<i64: 16, 256>}, {transform_indices = @transform_12, window_bounds = array<i64: 16, 128>}]} {
    %c0 = arith.constant 0 : index
    %c0_0 = arith.constant 0 : index
    %0 = vector.load %arg1[%c0, %c0_0] : memref<16x256xf32, #tpu.memory_space<vmem>>, vector<16x256xf32>
    %1 = arith.truncf %0 : vector<16x256xf32> to vector<16x256xbf16>
    %c0_1 = arith.constant 0 : index
    %c0_2 = arith.constant 0 : index
    %2 = vector.load %arg2[%c0_1, %c0_2] : memref<256x128xbf16, #tpu.memory_space<vmem>>, vector<256x128xbf16>
    %cst = arith.constant dense<0.000000e+00> : vector<16x128xf32>
    %3 = tpu.matmul %1, %2, %cst {dimension_numbers = #tpu.dot_dimension_numbers<[1], [0], [0], [1], [0, 0, 1, 1], [], []>} : vector<16x256xbf16>, vector<256x128xbf16>, vector<16x128xf32> -> vector<16x128xf32>
    %c0_3 = arith.constant 0 : index
    %c0_4 = arith.constant 0 : index
    %4 = vector.load %arg3[%c0_3, %c0_4] : memref<1x128xf32, #tpu.memory_space<vmem>>, vector<1x128xf32>
    %5 = vector.broadcast %4 : vector<1x128xf32> to vector<16x128xf32>
    %6 = arith.addf %3, %5 : vector<16x128xf32>
    %cst_5 = arith.constant 0.000000e+00 : f32
    %7 = vector.broadcast %cst_5 : f32 to vector<16x128xf32>
    %8 = arith.maximumf %6, %7 : vector<16x128xf32>
    %9 = arith.truncf %8 : vector<16x128xf32> to vector<16x128xbf16>
    %c0_6 = arith.constant 0 : index
    %c0_7 = arith.constant 0 : index
    %10 = vector.load %arg4[%c0_6, %c0_7] : memref<128x256xbf16, #tpu.memory_space<vmem>>, vector<128x256xbf16>
    %cst_8 = arith.constant dense<0.000000e+00> : vector<16x256xf32>
    %11 = tpu.matmul %9, %10, %cst_8 {dimension_numbers = #tpu.dot_dimension_numbers<[1], [0], [0], [1], [0, 0, 1, 1], [], []>} : vector<16x128xbf16>, vector<128x256xbf16>, vector<16x256xf32> -> vector<16x256xf32>
    %12 = vector.extract_strided_slice %11 {offsets = [0, 0], sizes = [16, 128], strides = [1, 1]} : vector<16x256xf32> to vector<16x128xf32>
    %c0_9 = arith.constant 0 : index
    %c0_10 = arith.constant 0 : index
    %13 = vector.load %arg5[%c0_9, %c0_10] : memref<1x128xf32, #tpu.memory_space<vmem>>, vector<1x128xf32>
    %14 = vector.broadcast %13 : vector<1x128xf32> to vector<16x128xf32>
    %15 = arith.addf %12, %14 : vector<16x128xf32>
    %cst_11 = arith.constant 0.000000e+00 : f32
    %16 = vector.broadcast %cst_11 : f32 to vector<16x128xf32>
    %17 = arith.maximumf %15, %16 : vector<16x128xf32>
    %18 = arith.truncf %17 : vector<16x128xf32> to vector<16x128xbf16>
    %19 = vector.extract_strided_slice %11 {offsets = [0, 128], sizes = [16, 128], strides = [1, 1]} : vector<16x256xf32> to vector<16x128xf32>
    %c0_12 = arith.constant 0 : index
    %c0_13 = arith.constant 0 : index
    %20 = vector.load %arg6[%c0_12, %c0_13] : memref<128x128xbf16, #tpu.memory_space<vmem>>, vector<128x128xbf16>
    %cst_14 = arith.constant dense<0.000000e+00> : vector<16x128xf32>
    %21 = tpu.matmul %18, %20, %cst_14 {dimension_numbers = #tpu.dot_dimension_numbers<[1], [0], [0], [1], [0, 0, 1, 1], [], []>} : vector<16x128xbf16>, vector<128x128xbf16>, vector<16x128xf32> -> vector<16x128xf32>
    %22 = arith.addf %19, %21 : vector<16x128xf32>
    %c0_15 = arith.constant 0 : index
    %c0_16 = arith.constant 0 : index
    %23 = vector.load %arg7[%c0_15, %c0_16] : memref<1x128xf32, #tpu.memory_space<vmem>>, vector<1x128xf32>
    %24 = vector.broadcast %23 : vector<1x128xf32> to vector<16x128xf32>
    %25 = arith.addf %22, %24 : vector<16x128xf32>
    %cst_17 = arith.constant 0.000000e+00 : f32
    %26 = vector.broadcast %cst_17 : f32 to vector<16x128xf32>
    %27 = arith.maximumf %25, %26 : vector<16x128xf32>
    %28 = arith.truncf %27 : vector<16x128xf32> to vector<16x128xbf16>
    %c0_18 = arith.constant 0 : index
    %c0_19 = arith.constant 0 : index
    %29 = vector.load %arg8[%c0_18, %c0_19] : memref<128x128xbf16, #tpu.memory_space<vmem>>, vector<128x128xbf16>
    %cst_20 = arith.constant dense<0.000000e+00> : vector<16x128xf32>
    %30 = tpu.matmul %28, %29, %cst_20 {dimension_numbers = #tpu.dot_dimension_numbers<[1], [0], [0], [1], [0, 0, 1, 1], [], []>} : vector<16x128xbf16>, vector<128x128xbf16>, vector<16x128xf32> -> vector<16x128xf32>
    %c0_21 = arith.constant 0 : index
    %c0_22 = arith.constant 0 : index
    %31 = vector.load %arg9[%c0_21, %c0_22] : memref<1x128xf32, #tpu.memory_space<vmem>>, vector<1x128xf32>
    %32 = vector.broadcast %31 : vector<1x128xf32> to vector<16x128xf32>
    %33 = arith.addf %30, %32 : vector<16x128xf32>
    %cst_23 = arith.constant 0.000000e+00 : f32
    %34 = vector.broadcast %cst_23 : f32 to vector<16x128xf32>
    %35 = arith.maximumf %33, %34 : vector<16x128xf32>
    %36 = arith.truncf %35 : vector<16x128xf32> to vector<16x128xbf16>
    %c0_24 = arith.constant 0 : index
    %c0_25 = arith.constant 0 : index
    %37 = vector.load %arg10[%c0_24, %c0_25] : memref<128x384xbf16, #tpu.memory_space<vmem>>, vector<128x384xbf16>
    %cst_26 = arith.constant dense<0.000000e+00> : vector<16x384xf32>
    %38 = tpu.matmul %36, %37, %cst_26 {dimension_numbers = #tpu.dot_dimension_numbers<[1], [0], [0], [1], [0, 0, 1, 1], [], []>} : vector<16x128xbf16>, vector<128x384xbf16>, vector<16x384xf32> -> vector<16x384xf32>
    %c0_27 = arith.constant 0 : index
    %c0_28 = arith.constant 0 : index
    %39 = vector.load %arg11[%c0_27, %c0_28] : memref<1x384xf32, #tpu.memory_space<vmem>>, vector<1x384xf32>
    %40 = vector.broadcast %39 : vector<1x384xf32> to vector<16x384xf32>
    %41 = arith.addf %38, %40 : vector<16x384xf32>
    %cst_29 = arith.constant 0.000000e+00 : f32
    %42 = vector.broadcast %cst_29 : f32 to vector<16x384xf32>
    %43 = arith.maximumf %41, %42 : vector<16x384xf32>
    %44 = vector.extract_strided_slice %43 {offsets = [0, 0], sizes = [16, 256], strides = [1, 1]} : vector<16x384xf32> to vector<16x256xf32>
    %45 = arith.truncf %44 : vector<16x256xf32> to vector<16x256xbf16>
    %c0_30 = arith.constant 0 : index
    %c0_31 = arith.constant 0 : index
    %46 = vector.load %arg12[%c0_30, %c0_31] : memref<16x256xbf16, #tpu.memory_space<vmem>>, vector<16x256xbf16>
    tpu.vector_store %arg12[%c0_30, %c0_31], %45 {strides = array<i32>} : memref<16x256xbf16, #tpu.memory_space<vmem>>, vector<16x256xbf16>,
    %47 = vector.extract_strided_slice %43 {offsets = [0, 256], sizes = [16, 128], strides = [1, 1]} : vector<16x384xf32> to vector<16x128xf32>
    %48 = arith.truncf %47 : vector<16x128xf32> to vector<16x128xbf16>
    %c0_32 = arith.constant 0 : index
    %c0_33 = arith.constant 0 : index
    %49 = vector.load %arg13[%c0_32, %c0_33] : memref<16x128xbf16, #tpu.memory_space<vmem>>, vector<16x128xbf16>
    tpu.vector_store %arg13[%c0_32, %c0_33], %48 {strides = array<i32>} : memref<16x128xbf16, #tpu.memory_space<vmem>>, vector<16x128xbf16>,
    return
  }
  func.func @transform_0(%arg0: i32) -> (i32, i32) {
    %c0_i32 = arith.constant 0 : i32
    %c0_i32_0 = arith.constant 0 : i32
    return %arg0, %c0_i32 : i32, i32
  }
  func.func @transform_1(%arg0: i32) -> (i32, i32) {
    %c0_i32 = arith.constant 0 : i32
    %c0_i32_0 = arith.constant 0 : i32
    %c0_i32_1 = arith.constant 0 : i32
    return %c0_i32, %c0_i32_0 : i32, i32
  }
  func.func @transform_2(%arg0: i32) -> (i32, i32) {
    %c0_i32 = arith.constant 0 : i32
    %c0_i32_0 = arith.constant 0 : i32
    %c0_i32_1 = arith.constant 0 : i32
    return %c0_i32, %c0_i32_0 : i32, i32
  }
  func.func @transform_3(%arg0: i32) -> (i32, i32) {
    %c0_i32 = arith.constant 0 : i32
    %c0_i32_0 = arith.constant 0 : i32
    %c0_i32_1 = arith.constant 0 : i32
    return %c0_i32, %c0_i32_0 : i32, i32
  }
  func.func @transform_4(%arg0: i32) -> (i32, i32) {
    %c0_i32 = arith.constant 0 : i32
    %c0_i32_0 = arith.constant 0 : i32
    %c0_i32_1 = arith.constant 0 : i32
    return %c0_i32, %c0_i32_0 : i32, i32
  }
  func.func @transform_5(%arg0: i32) -> (i32, i32) {
    %c0_i32 = arith.constant 0 : i32
    %c0_i32_0 = arith.constant 0 : i32
    %c0_i32_1 = arith.constant 0 : i32
    return %c0_i32, %c0_i32_0 : i32, i32
  }
  func.func @transform_6(%arg0: i32) -> (i32, i32) {
    %c0_i32 = arith.constant 0 : i32
    %c0_i32_0 = arith.constant 0 : i32
    %c0_i32_1 = arith.constant 0 : i32
    return %c0_i32, %c0_i32_0 : i32, i32
  }
  func.func @transform_7(%arg0: i32) -> (i32, i32) {
    %c0_i32 = arith.constant 0 : i32
    %c0_i32_0 = arith.constant 0 : i32
    %c0_i32_1 = arith.constant 0 : i32
    return %c0_i32, %c0_i32_0 : i32, i32
  }
  func.func @transform_8(%arg0: i32) -> (i32, i32) {
    %c0_i32 = arith.constant 0 : i32
    %c0_i32_0 = arith.constant 0 : i32
    %c0_i32_1 = arith.constant 0 : i32
    return %c0_i32, %c0_i32_0 : i32, i32
  }
  func.func @transform_9(%arg0: i32) -> (i32, i32) {
    %c0_i32 = arith.constant 0 : i32
    %c0_i32_0 = arith.constant 0 : i32
    %c0_i32_1 = arith.constant 0 : i32
    return %c0_i32, %c0_i32_0 : i32, i32
  }
  func.func @transform_10(%arg0: i32) -> (i32, i32) {
    %c0_i32 = arith.constant 0 : i32
    %c0_i32_0 = arith.constant 0 : i32
    %c0_i32_1 = arith.constant 0 : i32
    return %c0_i32, %c0_i32_0 : i32, i32
  }
  func.func @transform_11(%arg0: i32) -> (i32, i32) {
    %c0_i32 = arith.constant 0 : i32
    %c0_i32_0 = arith.constant 0 : i32
    return %arg0, %c0_i32 : i32, i32
  }
  func.func @transform_12(%arg0: i32) -> (i32, i32) {
    %c0_i32 = arith.constant 0 : i32
    %c0_i32_0 = arith.constant 0 : i32
    return %arg0, %c0_i32 : i32, i32
  }
}

</mosaic_0001>

<llo_original>
// kernel: autoencoder_forward.1
$region0: #{autoencoder_forward.1}
  #allocation0 [shape = 'u32[]', space=smem, size = 0x4, offset = 0x4, fixed_abs, tag = 'smem constant byte address 0x4 - core index']
  #allocation1 [shape = 'u32[144,128]{1,0:T(1,128)}', space=vmem, size = 0x12000, scoped, tag = 'internal scratch']
  %s0 = inlined_call_operand.hbm [shape: f32[2,256], index: 0, kind: input, shape index: {}]
  %s1 = inlined_call_operand.hbm [shape: bf16[256,128], index: 1, kind: input, shape index: {}]
  %s2 = inlined_call_operand.vmem [shape: f32[1,128], index: 2, kind: input, shape index: {}]
  %s3 = inlined_call_operand.hbm [shape: bf16[128,256], index: 3, kind: input, shape index: {}]
  %s4 = inlined_call_operand.vmem [shape: f32[1,128], index: 4, kind: input, shape index: {}]
  %s5 = inlined_call_operand.hbm [shape: bf16[128,128], index: 5, kind: input, shape index: {}]
  %s6 = inlined_call_operand.vmem [shape: f32[1,128], index: 6, kind: input, shape index: {}]
  %s7 = inlined_call_operand.hbm [shape: bf16[128,128], index: 7, kind: input, shape index: {}]
  %s8 = inlined_call_operand.vmem [shape: f32[1,128], index: 8, kind: input, shape index: {}]
  %s9 = inlined_call_operand.hbm [shape: bf16[128,384], index: 9, kind: input, shape index: {}]
  %s10 = inlined_call_operand.vmem [shape: f32[1,384], index: 10, kind: input, shape index: {}]
  %s11 = inlined_call_operand.hbm [shape: bf16[2,256], index: 11, kind: output, shape index: {0}]
  %s12 = inlined_call_operand.hbm [shape: bf16[2,128], index: 12, kind: output, shape index: {1}]
  %13 = xla_tuple %s11, %s12
  %s14 = sld [smem:[#allocation0]]
  $region86: #{autoencoder_forward.1} parent=0
    _
  %s16 = ssub.s32 1, %s14
  %s17 = scalar_select 0, %s16, %s14
  $region1: #{autoencoder_forward.1} parent=0
    #allocation2 [shape = 'u8[16384]{0}', space=vmem, size = 0x4000, scoped, tag = 'input window, operand 0, single buffered']
    #allocation3 [shape = 's32[1]{0}', space=sflag, size = 0x4, scoped, tag = 'scoped memory for autoencoder_forward.1']
    #allocation4 [shape = 's32[1]{0}', space=sflag, size = 0x4, scoped, tag = 'scoped memory for autoencoder_forward.1']
    #allocation5 [shape = 'u8[65536]{0}', space=vmem, size = 0x10000, scoped, tag = 'input window, operand 1, single buffered']
    #allocation6 [shape = 's32[1]{0}', space=sflag, size = 0x4, scoped, tag = 'scoped memory for autoencoder_forward.1']
    #allocation7 [shape = 'u8[65536]{0}', space=vmem, size = 0x10000, scoped, tag = 'input window, operand 3, single buffered']
    #allocation8 [shape = 'u8[32768]{0}', space=vmem, size = 0x8000, scoped, tag = 'input window, operand 5, single buffered']
    #allocation9 [shape = 's32[1]{0}', space=sflag, size = 0x4, scoped, tag = 'scoped memory for autoencoder_forward.1']
    #allocation10 [shape = 'u8[32768]{0}', space=vmem, size = 0x8000, scoped, tag = 'input window, operand 7, single buffered']
    #allocation11 [shape = 'u8[98304]{0}', space=vmem, size = 0x18000, scoped, tag = 'input window, operand 9, single buffered']
    #allocation12 [shape = 's32[1]{0}', space=sflag, size = 0x4, scoped, tag = 'scoped memory for autoencoder_forward.1']
    #allocation13 [shape = 'u8[8192]{0}', space=vmem, size = 0x2000, scoped, tag = 'output window, operand 0, single buffered']
    #allocation14 [shape = 'u8[4096]{0}', space=vmem, size = 0x1000, scoped, tag = 'output window, operand 1, single buffered']
    #allocation15 [shape = 's32[1]{0}', space=sflag, size = 0x4, scoped, tag = 'scoped memory for autoencoder_forward.1']
    %18 = vsyncpa [#allocation3], 0
    %19 = vsyncpa [#allocation6], 0
    %20 = vsyncpa [#allocation9], 0
    %21 = vsyncpa [#allocation12], 0
    %22 = vsyncpa [#allocation4], 0
    %23 = vsyncpa [#allocation15], 0
    // Predicated region
    $region2: #{autoencoder_forward.1} parent=1 // pred_check
      _
    $region3: #{autoencoder_forward.1} parent=1 // pred_check_branch
      %25 = sbr.rel (0) target = $region5
    $region4: #{autoencoder_forward.1} parent=1 // pred_region
      %s27 = ssub.s32 512, 64
      %28 = vsyncadd [#allocation3], %s27
      %s29 = sshll.u32 [#allocation2], 4
      %s30 = int_to_ptr.vmem [resolvable:$true] %s29
      %35 = dma.hbm_to_vmem [thread:$0]  %s0, 64, %s30, [#allocation3], 64, 64, 4
    $region5: #{autoencoder_forward.1} parent=1 // pred_fallthru
      _
    // Predicated region
    $region6: #{autoencoder_forward.1} parent=1 // pred_check
      _
    $region7: #{autoencoder_forward.1} parent=1 // pred_check_branch
      %37 = sbr.rel (0) target = $region9
    $region8: #{autoencoder_forward.1} parent=1 // pred_region
      %s39 = ssub.s32 2048, 2048
      %40 = vsyncadd [#allocation6], %s39
      %s41 = sshll.u32 [#allocation5], 4
      %s42 = int_to_ptr.vmem [resolvable:$true] %s41
      %47 = dma.hbm_to_vmem [thread:$0]  %s1, 2048, %s42, [#allocation6], 64, 64, 4
    $region9: #{autoencoder_forward.1} parent=1 // pred_fallthru
      _
    // Predicated region
    $region10: #{autoencoder_forward.1} parent=1 // pred_check
      _
    $region11: #{autoencoder_forward.1} parent=1 // pred_check_branch
      %49 = sbr.rel (0) target = $region13
    $region12: #{autoencoder_forward.1} parent=1 // pred_region
      _
    $region13: #{autoencoder_forward.1} parent=1 // pred_fallthru
      _
    // Predicated region
    $region14: #{autoencoder_forward.1} parent=1 // pred_check
      _
    $region15: #{autoencoder_forward.1} parent=1 // pred_check_branch
      %51 = sbr.rel (0) target = $region17
    $region16: #{autoencoder_forward.1} parent=1 // pred_region
      %s53 = ssub.s32 2048, 2048
      %54 = vsyncadd [#allocation6], %s53
      %s55 = sshll.u32 [#allocation7], 4
      %s56 = int_to_ptr.vmem [resolvable:$true] %s55
      %61 = dma.hbm_to_vmem [thread:$0]  %s3, 2048, %s56, [#allocation6], 128, 128, 8
    $region17: #{autoencoder_forward.1} parent=1 // pred_fallthru
      _
    // Predicated region
    $region18: #{autoencoder_forward.1} parent=1 // pred_check
      _
    $region19: #{autoencoder_forward.1} parent=1 // pred_check_branch
      %63 = sbr.rel (0) target = $region21
    $region20: #{autoencoder_forward.1} parent=1 // pred_region
      _
    $region21: #{autoencoder_forward.1} parent=1 // pred_fallthru
      _
    // Predicated region
    $region22: #{autoencoder_forward.1} parent=1 // pred_check
      _
    $region23: #{autoencoder_forward.1} parent=1 // pred_check_branch
      %65 = sbr.rel (0) target = $region25
    $region24: #{autoencoder_forward.1} parent=1 // pred_region
      %s67 = ssub.s32 1024, 1024
      %68 = vsyncadd [#allocation9], %s67
      %s69 = sshll.u32 [#allocation8], 4
      %s70 = int_to_ptr.vmem [resolvable:$true] %s69
      %75 = dma.hbm_to_vmem [thread:$0]  %s5, 1024, %s70, [#allocation9], 64, 64, 4
    $region25: #{autoencoder_forward.1} parent=1 // pred_fallthru
      _
    // Predicated region
    $region26: #{autoencoder_forward.1} parent=1 // pred_check
      _
    $region27: #{autoencoder_forward.1} parent=1 // pred_check_branch
      %77 = sbr.rel (0) target = $region29
    $region28: #{autoencoder_forward.1} parent=1 // pred_region
      _
    $region29: #{autoencoder_forward.1} parent=1 // pred_fallthru
      _
    // Predicated region
    $region30: #{autoencoder_forward.1} parent=1 // pred_check
      _
    $region31: #{autoencoder_forward.1} parent=1 // pred_check_branch
      %79 = sbr.rel (0) target = $region33
    $region32: #{autoencoder_forward.1} parent=1 // pred_region
      %s81 = ssub.s32 1024, 1024
      %82 = vsyncadd [#allocation9], %s81
      %s83 = sshll.u32 [#allocation10], 4
      %s84 = int_to_ptr.vmem [resolvable:$true] %s83
      %89 = dma.hbm_to_vmem [thread:$0]  %s7, 1024, %s84, [#allocation9], 64, 64, 4
    $region33: #{autoencoder_forward.1} parent=1 // pred_fallthru
      _
    // Predicated region
    $region34: #{autoencoder_forward.1} parent=1 // pred_check
      _
    $region35: #{autoencoder_forward.1} parent=1 // pred_check_branch
      %91 = sbr.rel (0) target = $region37
    $region36: #{autoencoder_forward.1} parent=1 // pred_region
      _
    $region37: #{autoencoder_forward.1} parent=1 // pred_fallthru
      _
    // Predicated region
    $region38: #{autoencoder_forward.1} parent=1 // pred_check
      _
    $region39: #{autoencoder_forward.1} parent=1 // pred_check_branch
      %93 = sbr.rel (0) target = $region41
    $region40: #{autoencoder_forward.1} parent=1 // pred_region
      %s95 = ssub.s32 3072, 3072
      %96 = vsyncadd [#allocation12], %s95
      %s97 = sshll.u32 [#allocation11], 4
      %s98 = int_to_ptr.vmem [resolvable:$true] %s97
      %103 = dma.hbm_to_vmem [thread:$0]  %s9, 3072, %s98, [#allocation12], 192, 192, 12
    $region41: #{autoencoder_forward.1} parent=1 // pred_fallthru
      _
    // Predicated region
    $region42: #{autoencoder_forward.1} parent=1 // pred_check
      _
    $region43: #{autoencoder_forward.1} parent=1 // pred_check_branch
      %105 = sbr.rel (0) target = $region45
    $region44: #{autoencoder_forward.1} parent=1 // pred_region
      _
    $region45: #{autoencoder_forward.1} parent=1 // pred_fallthru
      _
    // Predicated region
    $region46: #{autoencoder_forward.1} parent=1 // pred_check
      _
    $region47: #{autoencoder_forward.1} parent=1 // pred_check_branch
      %107 = sbr.rel (0) target = $region49
    $region48: #{autoencoder_forward.1} parent=1 // pred_region
      %108 = dma.done [#allocation3], 512
    $region49: #{autoencoder_forward.1} parent=1 // pred_fallthru
      _
    // Predicated region
    $region50: #{autoencoder_forward.1} parent=1 // pred_check
      _
    $region51: #{autoencoder_forward.1} parent=1 // pred_check_branch
      %110 = sbr.rel (0) target = $region53
    $region52: #{autoencoder_forward.1} parent=1 // pred_region
      %111 = dma.done [#allocation6], 2048
    $region53: #{autoencoder_forward.1} parent=1 // pred_fallthru
      _
    // Predicated region
    $region54: #{autoencoder_forward.1} parent=1 // pred_check
      _
    $region55: #{autoencoder_forward.1} parent=1 // pred_check_branch
      %113 = sbr.rel (0) target = $region57
    $region56: #{autoencoder_forward.1} parent=1 // pred_region
      %114 = dma.done [#allocation6], 2048
    $region57: #{autoencoder_forward.1} parent=1 // pred_fallthru
      _
    // Predicated region
    $region58: #{autoencoder_forward.1} parent=1 // pred_check
      _
    $region59: #{autoencoder_forward.1} parent=1 // pred_check_branch
      %116 = sbr.rel (0) target = $region61
    $region60: #{autoencoder_forward.1} parent=1 // pred_region
      %117 = dma.done [#allocation9], 1024
    $region61: #{autoencoder_forward.1} parent=1 // pred_fallthru
      _
    // Predicated region
    $region62: #{autoencoder_forward.1} parent=1 // pred_check
      _
    $region63: #{autoencoder_forward.1} parent=1 // pred_check_branch
      %119 = sbr.rel (0) target = $region65
    $region64: #{autoencoder_forward.1} parent=1 // pred_region
      %120 = dma.done [#allocation9], 1024
    $region65: #{autoencoder_forward.1} parent=1 // pred_fallthru
      _
    // Predicated region
    $region66: #{autoencoder_forward.1} parent=1 // pred_check
      _
    $region67: #{autoencoder_forward.1} parent=1 // pred_check_branch
      %122 = sbr.rel (0) target = $region69
    $region68: #{autoencoder_forward.1} parent=1 // pred_region
      %123 = dma.done [#allocation12], 3072
    $region69: #{autoencoder_forward.1} parent=1 // pred_fallthru
      _
    %v125 = vld [vmem:[#allocation2] sm:$0xf]
    %v126 = vld [vmem:[#allocation2 + $0x4] sm:$0xf]
    %v127 = vld [vmem:[#allocation2 + $0x8] sm:$0xf]
    %v128 = vld [vmem:[#allocation2 + $0xc] sm:$0xf]
    %v129 = vld [vmem:[#allocation2 + $0x10] sm:$0xf]
    %v130 = vld [vmem:[#allocation2 + $0x14] sm:$0xf]
    %v131 = vld [vmem:[#allocation2 + $0x18] sm:$0xf]
    %v132 = vld [vmem:[#allocation2 + $0x1c] sm:$0xf]
    %v141 = vcombine.low %v125, %v126
    %v142 = vcombine.low %v127, %v128
    %v144 = vunpack.c.l.s4 1983009808
    %v145 = vunpack.c.0.s8 %v144
    %v146 = vlaneseq
    %v147 = vshrl.u32 %v146, 7
    %v148 = vsub.s32 %v145, %v147
    %v149 = vrot.slane %v141, %v148
    %v151 = vunpack.c.l.s4 1983009808
    %v152 = vunpack.c.0.s8 %v151
    %v153 = vlaneseq
    %v154 = vshrl.u32 %v153, 7
    %v155 = vsub.s32 %v152, %v154
    %v156 = vrot.slane %v142, %v155
    %v157 = vcombine.low %v149, %v156
    %v158 = vcombine.high %v149, %v156
    %v159 = vcombine.low %v129, %v130
    %v160 = vcombine.low %v131, %v132
    %v162 = vunpack.c.l.s4 1983009808
    %v163 = vunpack.c.0.s8 %v162
    %v164 = vlaneseq
    %v165 = vshrl.u32 %v164, 7
    %v166 = vsub.s32 %v163, %v165
    %v167 = vrot.slane %v159, %v166
    %v169 = vunpack.c.l.s4 1983009808
    %v170 = vunpack.c.0.s8 %v169
    %v171 = vlaneseq
    %v172 = vshrl.u32 %v171, 7
    %v173 = vsub.s32 %v170, %v172
    %v174 = vrot.slane %v160, %v173
    %v175 = vcombine.low %v167, %v174
    %v176 = vcombine.high %v167, %v174
    %v181 = vpack.c.bf16 %v175, %v157
    %v182 = vpack.c.bf16 %v176, %v158
    %v183 = vld [vmem:[#allocation5] sm:$0xf]
    %v184 = vld [vmem:[#allocation5 + $0x4] sm:$0xf]
    %v185 = vld [vmem:[#allocation5 + $0x8] sm:$0xf]
    %v186 = vld [vmem:[#allocation5 + $0xc] sm:$0xf]
    %v187 = vld [vmem:[#allocation5 + $0x10] sm:$0xf]
    %v188 = vld [vmem:[#allocation5 + $0x14] sm:$0xf]
    %v189 = vld [vmem:[#allocation5 + $0x18] sm:$0xf]
    %v190 = vld [vmem:[#allocation5 + $0x1c] sm:$0xf]
    %v191 = vld [vmem:[#allocation5 + $0x20] sm:$0xf]
    %v192 = vld [vmem:[#allocation5 + $0x24] sm:$0xf]
    %v193 = vld [vmem:[#allocation5 + $0x28] sm:$0xf]
    %v194 = vld [vmem:[#allocation5 + $0x2c] sm:$0xf]
    %v195 = vld [vmem:[#allocation5 + $0x30] sm:$0xf]
    %v196 = vld [vmem:[#allocation5 + $0x34] sm:$0xf]
    %v197 = vld [vmem:[#allocation5 + $0x38] sm:$0xf]
    %v198 = vld [vmem:[#allocation5 + $0x3c] sm:$0xf]
    %v199 = vld [vmem:[#allocation5 + $0x40] sm:$0xf]
    %v200 = vld [vmem:[#allocation5 + $0x44] sm:$0xf]
    %v201 = vld [vmem:[#allocation5 + $0x48] sm:$0xf]
    %v202 = vld [vmem:[#allocation5 + $0x4c] sm:$0xf]
    %v203 = vld [vmem:[#allocation5 + $0x50] sm:$0xf]
    %v204 = vld [vmem:[#allocation5 + $0x54] sm:$0xf]
    %v205 = vld [vmem:[#allocation5 + $0x58] sm:$0xf]
    %v206 = vld [vmem:[#allocation5 + $0x5c] sm:$0xf]
    %v207 = vld [vmem:[#allocation5 + $0x60] sm:$0xf]
    %v208 = vld [vmem:[#allocation5 + $0x64] sm:$0xf]
    %v209 = vld [vmem:[#allocation5 + $0x68] sm:$0xf]
    %v210 = vld [vmem:[#allocation5 + $0x6c] sm:$0xf]
    %v211 = vld [vmem:[#allocation5 + $0x70] sm:$0xf]
    %v212 = vld [vmem:[#allocation5 + $0x74] sm:$0xf]
    %v213 = vld [vmem:[#allocation5 + $0x78] sm:$0xf]
    %v214 = vld [vmem:[#allocation5 + $0x7c] sm:$0xf]
    %v215 = vld [vmem:[%s2] sm:$0x1]
    %v217 = vlaneseq
    %v218 = vshrl.u32 %v217, 7
    %v219 = vsub.s32 0, %v218
    %v220 = vrot.slane %v215, %v219
    %v254 = vunpack.c.l.b16 %v183
    %v255 = vunpack.c.l.b16 %v184
    %v256 = vunpack.c.l.b16 %v185
    %v257 = vunpack.c.l.b16 %v186
    %v258 = vunpack.c.l.b16 %v187
    %v259 = vunpack.c.l.b16 %v188
    %v260 = vunpack.c.l.b16 %v189
    %v261 = vunpack.c.l.b16 %v190
    %v262 = vunpack.c.l.b16 %v191
    %v263 = vunpack.c.l.b16 %v192
    %v264 = vunpack.c.l.b16 %v193
    %v265 = vunpack.c.l.b16 %v194
    %v266 = vunpack.c.l.b16 %v195
    %v267 = vunpack.c.l.b16 %v196
    %v268 = vunpack.c.l.b16 %v197
    %v269 = vunpack.c.l.b16 %v198
    %v270 = vunpack.c.l.b16 %v199
    %v271 = vunpack.c.l.b16 %v200
    %v272 = vunpack.c.l.b16 %v201
    %v273 = vunpack.c.l.b16 %v202
    %v274 = vunpack.c.l.b16 %v203
    %v275 = vunpack.c.l.b16 %v204
    %v276 = vunpack.c.l.b16 %v205
    %v277 = vunpack.c.l.b16 %v206
    %v278 = vunpack.c.l.b16 %v207
    %v279 = vunpack.c.l.b16 %v208
    %v280 = vunpack.c.l.b16 %v209
    %v281 = vunpack.c.l.b16 %v210
    %v282 = vunpack.c.l.b16 %v211
    %v283 = vunpack.c.l.b16 %v212
    %v284 = vunpack.c.l.b16 %v213
    %v285 = vunpack.c.l.b16 %v214
    %v286 = vpack.c.b16 %v255, %v254
    %v287 = vpack.c.b16 %v257, %v256
    %v288 = vpack.c.b16 %v259, %v258
    %v289 = vpack.c.b16 %v261, %v260
    %v290 = vpack.c.b16 %v263, %v262
    %v291 = vpack.c.b16 %v265, %v264
    %v292 = vpack.c.b16 %v267, %v266
    %v293 = vpack.c.b16 %v269, %v268
    %v294 = vpack.c.b16 %v271, %v270
    %v295 = vpack.c.b16 %v273, %v272
    %v296 = vpack.c.b16 %v275, %v274
    %v297 = vpack.c.b16 %v277, %v276
    %v298 = vpack.c.b16 %v279, %v278
    %v299 = vpack.c.b16 %v281, %v280
    %v300 = vpack.c.b16 %v283, %v282
    %v301 = vpack.c.b16 %v285, %v284
    %318 = vmatprep.subr.bf16.mxu0 0
    %319 = vmatpush1.bf16.msra.mxu0 %v293
    %320 = vmatprep.subr.bf16.mxu0 0
    %321 = vmatpush1.bf16.msra.mxu0 %v292
    %322 = vmatprep.subr.bf16.mxu0 0
    %323 = vmatpush1.bf16.msra.mxu0 %v291
    %324 = vmatprep.subr.bf16.mxu0 0
    %325 = vmatpush1.bf16.msra.mxu0 %v290
    %326 = vmatprep.subr.bf16.mxu0 0
    %327 = vmatpush1.bf16.msra.mxu0 %v289
    %328 = vmatprep.subr.bf16.mxu0 0
    %329 = vmatpush1.bf16.msra.mxu0 %v288
    %330 = vmatprep.subr.bf16.mxu0 0
    %331 = vmatpush1.bf16.msra.mxu0 %v287
    %332 = vmatprep.subr.bf16.mxu0 0
    %333 = vmatpush1.bf16.msra.mxu0 %v286
    %334 = vmatprep.subr.bf16.mxu0 0
    %335 = vmatpush2.bf16.msra.mxu0 %v301
    %336 = vmatprep.subr.bf16.mxu0 0
    %337 = vmatpush2.bf16.msra.mxu0 %v300
    %338 = vmatprep.subr.bf16.mxu0 0
    %339 = vmatpush2.bf16.msra.mxu0 %v299
    %340 = vmatprep.subr.bf16.mxu0 0
    %341 = vmatpush2.bf16.msra.mxu0 %v298
    %342 = vmatprep.subr.bf16.mxu0 0
    %343 = vmatpush2.bf16.msra.mxu0 %v297
    %344 = vmatprep.subr.bf16.mxu0 0
    %345 = vmatpush2.bf16.msra.mxu0 %v296
    %346 = vmatprep.subr.bf16.mxu0 0
    %347 = vmatpush2.bf16.msra.mxu0 %v295
    %348 = vmatprep.subr.bf16.mxu0 0
    %349 = vmatpush2.bf16.msra.mxu0 %v294
    %350 = vmatprep.mubr.bf16.mxu0 %v182
    %351 = vmatmul.mubr.bf16.gmra.mxu0 %v181
    %v352 = vpop.f32.mrf.mxu0
    %v353 = vadd.f32 %v220, %v352
    %v354 = vpop.f32.mrf.mxu0
    %v355 = vpop.f32.mrf.mxu0
    %v356 = vadd.f32 %v220, %v355
    %v357 = vpop.f32.mrf.mxu0
    %358 = vdwg.mxu0
    %v359 = vmax.f32 %v353, 0.0
    %v360 = vmax.f32 %v356, 0.0
    %v361 = vpack.c.bf16 %v360, %v359
    %v362 = vld [vmem:[#allocation7] sm:$0xff]
    %v363 = vld [vmem:[#allocation7 + $0x8] sm:$0xff]
    %v364 = vld [vmem:[#allocation7 + $0x10] sm:$0xff]
    %v365 = vld [vmem:[#allocation7 + $0x18] sm:$0xff]
    %v366 = vld [vmem:[#allocation7 + $0x20] sm:$0xff]
    %v367 = vld [vmem:[#allocation7 + $0x28] sm:$0xff]
    %v368 = vld [vmem:[#allocation7 + $0x30] sm:$0xff]
    %v369 = vld [vmem:[#allocation7 + $0x38] sm:$0xff]
    %v370 = vld [vmem:[#allocation7 + $0x40] sm:$0xff]
    %v371 = vld [vmem:[#allocation7 + $0x48] sm:$0xff]
    %v372 = vld [vmem:[#allocation7 + $0x50] sm:$0xff]
    %v373 = vld [vmem:[#allocation7 + $0x58] sm:$0xff]
    %v374 = vld [vmem:[#allocation7 + $0x60] sm:$0xff]
    %v375 = vld [vmem:[#allocation7 + $0x68] sm:$0xff]
    %v376 = vld [vmem:[#allocation7 + $0x70] sm:$0xff]
    %v377 = vld [vmem:[#allocation7 + $0x78] sm:$0xff]
    %v394 = vunpack.c.l.b16 %v362
    %v395 = vunpack.c.h.b16 %v362
    %v396 = vunpack.c.l.b16 %v363
    %v397 = vunpack.c.h.b16 %v363
    %v398 = vunpack.c.l.b16 %v364
    %v399 = vunpack.c.h.b16 %v364
    %v400 = vunpack.c.l.b16 %v365
    %v401 = vunpack.c.h.b16 %v365
    %v402 = vunpack.c.l.b16 %v366
    %v403 = vunpack.c.h.b16 %v366
    %v404 = vunpack.c.l.b16 %v367
    %v405 = vunpack.c.h.b16 %v367
    %v406 = vunpack.c.l.b16 %v368
    %v407 = vunpack.c.h.b16 %v368
    %v408 = vunpack.c.l.b16 %v369
    %v409 = vunpack.c.h.b16 %v369
    %v410 = vunpack.c.l.b16 %v370
    %v411 = vunpack.c.h.b16 %v370
    %v412 = vunpack.c.l.b16 %v371
    %v413 = vunpack.c.h.b16 %v371
    %v414 = vunpack.c.l.b16 %v372
    %v415 = vunpack.c.h.b16 %v372
    %v416 = vunpack.c.l.b16 %v373
    %v417 = vunpack.c.h.b16 %v373
    %v418 = vunpack.c.l.b16 %v374
    %v419 = vunpack.c.h.b16 %v374
    %v420 = vunpack.c.l.b16 %v375
    %v421 = vunpack.c.h.b16 %v375
    %v422 = vunpack.c.l.b16 %v376
    %v423 = vunpack.c.h.b16 %v376
    %v424 = vunpack.c.l.b16 %v377
    %v425 = vunpack.c.h.b16 %v377
    %v426 = vpack.c.b16 %v396, %v394
    %v427 = vpack.c.b16 %v397, %v395
    %v428 = vpack.c.b16 %v400, %v398
    %v429 = vpack.c.b16 %v401, %v399
    %v430 = vpack.c.b16 %v404, %v402
    %v431 = vpack.c.b16 %v405, %v403
    %v432 = vpack.c.b16 %v408, %v406
    %v433 = vpack.c.b16 %v409, %v407
    %v434 = vpack.c.b16 %v412, %v410
    %v435 = vpack.c.b16 %v413, %v411
    %v436 = vpack.c.b16 %v416, %v414
    %v437 = vpack.c.b16 %v417, %v415
    %v438 = vpack.c.b16 %v420, %v418
    %v439 = vpack.c.b16 %v421, %v419
    %v440 = vpack.c.b16 %v424, %v422
    %v441 = vpack.c.b16 %v425, %v423
    %458 = vmatprep.subr.bf16.mxu0 %v441
    %459 = vmatpush1.bf16.msra.mxu0 %v440
    %460 = vmatprep.subr.bf16.mxu0 %v439
    %461 = vmatpush1.bf16.msra.mxu0 %v438
    %462 = vmatprep.subr.bf16.mxu0 %v437
    %463 = vmatpush1.bf16.msra.mxu0 %v436
    %464 = vmatprep.subr.bf16.mxu0 %v435
    %465 = vmatpush1.bf16.msra.mxu0 %v434
    %466 = vmatprep.subr.bf16.mxu0 %v433
    %467 = vmatpush1.bf16.msra.mxu0 %v432
    %468 = vmatprep.subr.bf16.mxu0 %v431
    %469 = vmatpush1.bf16.msra.mxu0 %v430
    %470 = vmatprep.subr.bf16.mxu0 %v429
    %471 = vmatpush1.bf16.msra.mxu0 %v428
    %472 = vmatprep.subr.bf16.mxu0 %v427
    %473 = vmatpush1.bf16.msra.mxu0 %v426
    %474 = vmatprep.subr.bf16.mxu0 0
    %475 = vmatpush2.bf16.msra.mxu0 0
    %476 = vmatprep.subr.bf16.mxu0 0
    %477 = vmatpush2.bf16.msra.mxu0 0
    %478 = vmatprep.subr.bf16.mxu0 0
    %479 = vmatpush2.bf16.msra.mxu0 0
    %480 = vmatprep.subr.bf16.mxu0 0
    %481 = vmatpush2.bf16.msra.mxu0 0
    %482 = vmatprep.subr.bf16.mxu0 0
    %483 = vmatpush2.bf16.msra.mxu0 0
    %484 = vmatprep.subr.bf16.mxu0 0
    %485 = vmatpush2.bf16.msra.mxu0 0
    %486 = vmatprep.subr.bf16.mxu0 0
    %487 = vmatpush2.bf16.msra.mxu0 0
    %488 = vmatprep.subr.bf16.mxu0 0
    %489 = vmatpush2.bf16.msra.mxu0 0
    %490 = vmatprep.mubr.bf16.mxu0 0
    %491 = vmatmul.mubr.bf16.gmra.mxu0 %v361
    %v492 = vpop.f32.mrf.mxu0
    %v493 = vadd.f32 0.0, %v492
    %v494 = vpop.f32.mrf.mxu0
    %v495 = vadd.f32 0.0, %v494
    %v496 = vpop.f32.mrf.mxu0
    %v497 = vadd.f32 0.0, %v496
    %v498 = vpop.f32.mrf.mxu0
    %v499 = vadd.f32 0.0, %v498
    %500 = vdwg.mxu0
    %v501 = vld [vmem:[%s4] sm:$0x1]
    %v503 = vlaneseq
    %v504 = vshrl.u32 %v503, 7
    %v505 = vsub.s32 0, %v504
    %v506 = vrot.slane %v501, %v505
    %v508 = vadd.f32 %v493, %v506
    %v509 = vadd.f32 %v497, %v506
    %v510 = vmax.f32 %v508, 0.0
    %v511 = vmax.f32 %v509, 0.0
    %v512 = vpack.c.bf16 %v511, %v510
    %v513 = vld [vmem:[#allocation8] sm:$0xf]
    %v514 = vld [vmem:[#allocation8 + $0x4] sm:$0xf]
    %v515 = vld [vmem:[#allocation8 + $0x8] sm:$0xf]
    %v516 = vld [vmem:[#allocation8 + $0xc] sm:$0xf]
    %v517 = vld [vmem:[#allocation8 + $0x10] sm:$0xf]
    %v518 = vld [vmem:[#allocation8 + $0x14] sm:$0xf]
    %v519 = vld [vmem:[#allocation8 + $0x18] sm:$0xf]
    %v520 = vld [vmem:[#allocation8 + $0x1c] sm:$0xf]
    %v521 = vld [vmem:[#allocation8 + $0x20] sm:$0xf]
    %v522 = vld [vmem:[#allocation8 + $0x24] sm:$0xf]
    %v523 = vld [vmem:[#allocation8 + $0x28] sm:$0xf]
    %v524 = vld [vmem:[#allocation8 + $0x2c] sm:$0xf]
    %v525 = vld [vmem:[#allocation8 + $0x30] sm:$0xf]
    %v526 = vld [vmem:[#allocation8 + $0x34] sm:$0xf]
    %v527 = vld [vmem:[#allocation8 + $0x38] sm:$0xf]
    %v528 = vld [vmem:[#allocation8 + $0x3c] sm:$0xf]
    %v545 = vunpack.c.l.b16 %v513
    %v546 = vunpack.c.l.b16 %v514
    %v547 = vunpack.c.l.b16 %v515
    %v548 = vunpack.c.l.b16 %v516
    %v549 = vunpack.c.l.b16 %v517
    %v550 = vunpack.c.l.b16 %v518
    %v551 = vunpack.c.l.b16 %v519
    %v552 = vunpack.c.l.b16 %v520
    %v553 = vunpack.c.l.b16 %v521
    %v554 = vunpack.c.l.b16 %v522
    %v555 = vunpack.c.l.b16 %v523
    %v556 = vunpack.c.l.b16 %v524
    %v557 = vunpack.c.l.b16 %v525
    %v558 = vunpack.c.l.b16 %v526
    %v559 = vunpack.c.l.b16 %v527
    %v560 = vunpack.c.l.b16 %v528
    %v561 = vpack.c.b16 %v546, %v545
    %v562 = vpack.c.b16 %v548, %v547
    %v563 = vpack.c.b16 %v550, %v549
    %v564 = vpack.c.b16 %v552, %v551
    %v565 = vpack.c.b16 %v554, %v553
    %v566 = vpack.c.b16 %v556, %v555
    %v567 = vpack.c.b16 %v558, %v557
    %v568 = vpack.c.b16 %v560, %v559
    %577 = vmatprep.subr.bf16.mxu0 0
    %578 = vmatpush1.bf16.msra.mxu0 %v568
    %579 = vmatprep.subr.bf16.mxu0 0
    %580 = vmatpush1.bf16.msra.mxu0 %v567
    %581 = vmatprep.subr.bf16.mxu0 0
    %582 = vmatpush1.bf16.msra.mxu0 %v566
    %583 = vmatprep.subr.bf16.mxu0 0
    %584 = vmatpush1.bf16.msra.mxu0 %v565
    %585 = vmatprep.subr.bf16.mxu0 0
    %586 = vmatpush1.bf16.msra.mxu0 %v564
    %587 = vmatprep.subr.bf16.mxu0 0
    %588 = vmatpush1.bf16.msra.mxu0 %v563
    %589 = vmatprep.subr.bf16.mxu0 0
    %590 = vmatpush1.bf16.msra.mxu0 %v562
    %591 = vmatprep.subr.bf16.mxu0 0
    %592 = vmatpush1.bf16.msra.mxu0 %v561
    %593 = vmatprep.subr.bf16.mxu0 0
    %594 = vmatpush2.bf16.msra.mxu0 0
    %595 = vmatprep.subr.bf16.mxu0 0
    %596 = vmatpush2.bf16.msra.mxu0 0
    %597 = vmatprep.subr.bf16.mxu0 0
    %598 = vmatpush2.bf16.msra.mxu0 0
    %599 = vmatprep.subr.bf16.mxu0 0
    %600 = vmatpush2.bf16.msra.mxu0 0
    %601 = vmatprep.subr.bf16.mxu0 0
    %602 = vmatpush2.bf16.msra.mxu0 0
    %603 = vmatprep.subr.bf16.mxu0 0
    %604 = vmatpush2.bf16.msra.mxu0 0
    %605 = vmatprep.subr.bf16.mxu0 0
    %606 = vmatpush2.bf16.msra.mxu0 0
    %607 = vmatprep.subr.bf16.mxu0 0
    %608 = vmatpush2.bf16.msra.mxu0 0
    %609 = vmatprep.mubr.bf16.mxu0 0
    %610 = vmatmul.mubr.bf16.gmra.mxu0 %v512
    %v611 = vpop.f32.mrf.mxu0
    %v612 = vadd.f32 0.0, %v611
    %v613 = vpop.f32.mrf.mxu0
    %v614 = vpop.f32.mrf.mxu0
    %v615 = vadd.f32 0.0, %v614
    %v616 = vpop.f32.mrf.mxu0
    %617 = vdwg.mxu0
    %v618 = vadd.f32 %v495, %v612
    %v619 = vadd.f32 %v499, %v615
    %v620 = vld [vmem:[%s6] sm:$0x1]
    %v622 = vlaneseq
    %v623 = vshrl.u32 %v622, 7
    %v624 = vsub.s32 0, %v623
    %v625 = vrot.slane %v620, %v624
    %v627 = vadd.f32 %v618, %v625
    %v628 = vadd.f32 %v619, %v625
    %v629 = vmax.f32 %v627, 0.0
    %v630 = vmax.f32 %v628, 0.0
    %v631 = vpack.c.bf16 %v630, %v629
    %v632 = vld [vmem:[#allocation10] sm:$0xf]
    %v633 = vld [vmem:[#allocation10 + $0x4] sm:$0xf]
    %v634 = vld [vmem:[#allocation10 + $0x8] sm:$0xf]
    %v635 = vld [vmem:[#allocation10 + $0xc] sm:$0xf]
    %v636 = vld [vmem:[#allocation10 + $0x10] sm:$0xf]
    %v637 = vld [vmem:[#allocation10 + $0x14] sm:$0xf]
    %v638 = vld [vmem:[#allocation10 + $0x18] sm:$0xf]
    %v639 = vld [vmem:[#allocation10 + $0x1c] sm:$0xf]
    %v640 = vld [vmem:[#allocation10 + $0x20] sm:$0xf]
    %v641 = vld [vmem:[#allocation10 + $0x24] sm:$0xf]
    %v642 = vld [vmem:[#allocation10 + $0x28] sm:$0xf]
    %v643 = vld [vmem:[#allocation10 + $0x2c] sm:$0xf]
    %v644 = vld [vmem:[#allocation10 + $0x30] sm:$0xf]
    %v645 = vld [vmem:[#allocation10 + $0x34] sm:$0xf]
    %v646 = vld [vmem:[#allocation10 + $0x38] sm:$0xf]
    %v647 = vld [vmem:[#allocation10 + $0x3c] sm:$0xf]
    %v648 = vld [vmem:[%s8] sm:$0x1]
    %v650 = vlaneseq
    %v651 = vshrl.u32 %v650, 7
    %v652 = vsub.s32 0, %v651
    %v653 = vrot.slane %v648, %v652
    %v671 = vunpack.c.l.b16 %v632
    %v672 = vunpack.c.l.b16 %v633
    %v673 = vunpack.c.l.b16 %v634
    %v674 = vunpack.c.l.b16 %v635
    %v675 = vunpack.c.l.b16 %v636
    %v676 = vunpack.c.l.b16 %v637
    %v677 = vunpack.c.l.b16 %v638
    %v678 = vunpack.c.l.b16 %v639
    %v679 = vunpack.c.l.b16 %v640
    %v680 = vunpack.c.l.b16 %v641
    %v681 = vunpack.c.l.b16 %v642
    %v682 = vunpack.c.l.b16 %v643
    %v683 = vunpack.c.l.b16 %v644
    %v684 = vunpack.c.l.b16 %v645
    %v685 = vunpack.c.l.b16 %v646
    %v686 = vunpack.c.l.b16 %v647
    %v687 = vpack.c.b16 %v672, %v671
    %v688 = vpack.c.b16 %v674, %v673
    %v689 = vpack.c.b16 %v676, %v675
    %v690 = vpack.c.b16 %v678, %v677
    %v691 = vpack.c.b16 %v680, %v679
    %v692 = vpack.c.b16 %v682, %v681
    %v693 = vpack.c.b16 %v684, %v683
    %v694 = vpack.c.b16 %v686, %v685
    %703 = vmatprep.subr.bf16.mxu0 0
    %704 = vmatpush1.bf16.msra.mxu0 %v694
    %705 = vmatprep.subr.bf16.mxu0 0
    %706 = vmatpush1.bf16.msra.mxu0 %v693
    %707 = vmatprep.subr.bf16.mxu0 0
    %708 = vmatpush1.bf16.msra.mxu0 %v692
    %709 = vmatprep.subr.bf16.mxu0 0
    %710 = vmatpush1.bf16.msra.mxu0 %v691
    %711 = vmatprep.subr.bf16.mxu0 0
    %712 = vmatpush1.bf16.msra.mxu0 %v690
    %713 = vmatprep.subr.bf16.mxu0 0
    %714 = vmatpush1.bf16.msra.mxu0 %v689
    %715 = vmatprep.subr.bf16.mxu0 0
    %716 = vmatpush1.bf16.msra.mxu0 %v688
    %717 = vmatprep.subr.bf16.mxu0 0
    %718 = vmatpush1.bf16.msra.mxu0 %v687
    %719 = vmatprep.subr.bf16.mxu0 0
    %720 = vmatpush2.bf16.msra.mxu0 0
    %721 = vmatprep.subr.bf16.mxu0 0
    %722 = vmatpush2.bf16.msra.mxu0 0
    %723 = vmatprep.subr.bf16.mxu0 0
    %724 = vmatpush2.bf16.msra.mxu0 0
    %725 = vmatprep.subr.bf16.mxu0 0
    %726 = vmatpush2.bf16.msra.mxu0 0
    %727 = vmatprep.subr.bf16.mxu0 0
    %728 = vmatpush2.bf16.msra.mxu0 0
    %729 = vmatprep.subr.bf16.mxu0 0
    %730 = vmatpush2.bf16.msra.mxu0 0
    %731 = vmatprep.subr.bf16.mxu0 0
    %732 = vmatpush2.bf16.msra.mxu0 0
    %733 = vmatprep.subr.bf16.mxu0 0
    %734 = vmatpush2.bf16.msra.mxu0 0
    %735 = vmatprep.mubr.bf16.mxu0 0
    %736 = vmatmul.mubr.bf16.gmra.mxu0 %v631
    %v737 = vpop.f32.mrf.mxu0
    %v738 = vadd.f32 %v653, %v737
    %v739 = vpop.f32.mrf.mxu0
    %v740 = vpop.f32.mrf.mxu0
    %v741 = vadd.f32 %v653, %v740
    %v742 = vpop.f32.mrf.mxu0
    %743 = vdwg.mxu0
    %v744 = vmax.f32 %v738, 0.0
    %v745 = vmax.f32 %v741, 0.0
    %v746 = vpack.c.bf16 %v745, %v744
    %v747 = vld [vmem:[#allocation11] sm:$0xff]
    %v748 = vld [vmem:[#allocation11 + $0x8] sm:$0xf]
    %v749 = vld [vmem:[#allocation11 + $0xc] sm:$0xff]
    %v750 = vld [vmem:[#allocation11 + $0x14] sm:$0xf]
    %v751 = vld [vmem:[#allocation11 + $0x18] sm:$0xff]
    %v752 = vld [vmem:[#allocation11 + $0x20] sm:$0xf]
    %v753 = vld [vmem:[#allocation11 + $0x24] sm:$0xff]
    %v754 = vld [vmem:[#allocation11 + $0x2c] sm:$0xf]
    %v755 = vld [vmem:[#allocation11 + $0x30] sm:$0xff]
    %v756 = vld [vmem:[#allocation11 + $0x38] sm:$0xf]
    %v757 = vld [vmem:[#allocation11 + $0x3c] sm:$0xff]
    %v758 = vld [vmem:[#allocation11 + $0x44] sm:$0xf]
    %v759 = vld [vmem:[#allocation11 + $0x48] sm:$0xff]
    %v760 = vld [vmem:[#allocation11 + $0x50] sm:$0xf]
    %v761 = vld [vmem:[#allocation11 + $0x54] sm:$0xff]
    %v762 = vld [vmem:[#allocation11 + $0x5c] sm:$0xf]
    %v763 = vld [vmem:[#allocation11 + $0x60] sm:$0xff]
    %v764 = vld [vmem:[#allocation11 + $0x68] sm:$0xf]
    %v765 = vld [vmem:[#allocation11 + $0x6c] sm:$0xff]
    %v766 = vld [vmem:[#allocation11 + $0x74] sm:$0xf]
    %v767 = vld [vmem:[#allocation11 + $0x78] sm:$0xff]
    %v768 = vld [vmem:[#allocation11 + $0x80] sm:$0xf]
    %v769 = vld [vmem:[#allocation11 + $0x84] sm:$0xff]
    %v770 = vld [vmem:[#allocation11 + $0x8c] sm:$0xf]
    %v771 = vld [vmem:[#allocation11 + $0x90] sm:$0xff]
    %v772 = vld [vmem:[#allocation11 + $0x98] sm:$0xf]
    %v773 = vld [vmem:[#allocation11 + $0x9c] sm:$0xff]
    %v774 = vld [vmem:[#allocation11 + $0xa4] sm:$0xf]
    %v775 = vld [vmem:[#allocation11 + $0xa8] sm:$0xff]
    %v776 = vld [vmem:[#allocation11 + $0xb0] sm:$0xf]
    %v777 = vld [vmem:[#allocation11 + $0xb4] sm:$0xff]
    %v778 = vld [vmem:[#allocation11 + $0xbc] sm:$0xf]
    %v779 = vld [vmem:[%s10] sm:$0x7]
    %v781 = vlaneseq
    %v782 = vshrl.u32 %v781, 7
    %v783 = vsub.s32 0, %v782
    %v784 = vrot.slane %v779, %v783
    %v785 = vlaneseq
    %v786 = vshrl.u32 %v785, 7
    %v787 = vsub.s32 1, %v786
    %v788 = vrot.slane %v779, %v787
    %v789 = vlaneseq
    %v790 = vshrl.u32 %v789, 7
    %v791 = vsub.s32 2, %v790
    %v792 = vrot.slane %v779, %v791
    %v828 = vunpack.c.l.b16 %v747
    %v829 = vunpack.c.h.b16 %v747
    %v830 = vunpack.c.l.b16 %v748
    %v831 = vunpack.c.l.b16 %v749
    %v832 = vunpack.c.h.b16 %v749
    %v833 = vunpack.c.l.b16 %v750
    %v834 = vunpack.c.l.b16 %v751
    %v835 = vunpack.c.h.b16 %v751
    %v836 = vunpack.c.l.b16 %v752
    %v837 = vunpack.c.l.b16 %v753
    %v838 = vunpack.c.h.b16 %v753
    %v839 = vunpack.c.l.b16 %v754
    %v840 = vunpack.c.l.b16 %v755
    %v841 = vunpack.c.h.b16 %v755
    %v842 = vunpack.c.l.b16 %v756
    %v843 = vunpack.c.l.b16 %v757
    %v844 = vunpack.c.h.b16 %v757
    %v845 = vunpack.c.l.b16 %v758
    %v846 = vunpack.c.l.b16 %v759
    %v847 = vunpack.c.h.b16 %v759
    %v848 = vunpack.c.l.b16 %v760
    %v849 = vunpack.c.l.b16 %v761
    %v850 = vunpack.c.h.b16 %v761
    %v851 = vunpack.c.l.b16 %v762
    %v852 = vunpack.c.l.b16 %v763
    %v853 = vunpack.c.h.b16 %v763
    %v854 = vunpack.c.l.b16 %v764
    %v855 = vunpack.c.l.b16 %v765
    %v856 = vunpack.c.h.b16 %v765
    %v857 = vunpack.c.l.b16 %v766
    %v858 = vunpack.c.l.b16 %v767
    %v859 = vunpack.c.h.b16 %v767
    %v860 = vunpack.c.l.b16 %v768
    %v861 = vunpack.c.l.b16 %v769
    %v862 = vunpack.c.h.b16 %v769
    %v863 = vunpack.c.l.b16 %v770
    %v864 = vunpack.c.l.b16 %v771
    %v865 = vunpack.c.h.b16 %v771
    %v866 = vunpack.c.l.b16 %v772
    %v867 = vunpack.c.l.b16 %v773
    %v868 = vunpack.c.h.b16 %v773
    %v869 = vunpack.c.l.b16 %v774
    %v870 = vunpack.c.l.b16 %v775
    %v871 = vunpack.c.h.b16 %v775
    %v872 = vunpack.c.l.b16 %v776
    %v873 = vunpack.c.l.b16 %v777
    %v874 = vunpack.c.h.b16 %v777
    %v875 = vunpack.c.l.b16 %v778
    %v876 = vpack.c.b16 %v831, %v828
    %v877 = vpack.c.b16 %v832, %v829
    %v878 = vpack.c.b16 %v833, %v830
    %v879 = vpack.c.b16 %v837, %v834
    %v880 = vpack.c.b16 %v838, %v835
    %v881 = vpack.c.b16 %v839, %v836
    %v882 = vpack.c.b16 %v843, %v840
    %v883 = vpack.c.b16 %v844, %v841
    %v884 = vpack.c.b16 %v845, %v842
    %v885 = vpack.c.b16 %v849, %v846
    %v886 = vpack.c.b16 %v850, %v847
    %v887 = vpack.c.b16 %v851, %v848
    %v888 = vpack.c.b16 %v855, %v852
    %v889 = vpack.c.b16 %v856, %v853
    %v890 = vpack.c.b16 %v857, %v854
    %v891 = vpack.c.b16 %v861, %v858
    %v892 = vpack.c.b16 %v862, %v859
    %v893 = vpack.c.b16 %v863, %v860
    %v894 = vpack.c.b16 %v867, %v864
    %v895 = vpack.c.b16 %v868, %v865
    %v896 = vpack.c.b16 %v869, %v866
    %v897 = vpack.c.b16 %v873, %v870
    %v898 = vpack.c.b16 %v874, %v871
    %v899 = vpack.c.b16 %v875, %v872
    %924 = vmatprep.subr.bf16.mxu0 %v898
    %925 = vmatpush1.bf16.msra.mxu0 %v897
    %926 = vmatprep.subr.bf16.mxu0 %v895
    %927 = vmatpush1.bf16.msra.mxu0 %v894
    %928 = vmatprep.subr.bf16.mxu0 %v892
    %929 = vmatpush1.bf16.msra.mxu0 %v891
    %930 = vmatprep.subr.bf16.mxu0 %v889
    %931 = vmatpush1.bf16.msra.mxu0 %v888
    %932 = vmatprep.subr.bf16.mxu0 %v886
    %933 = vmatpush1.bf16.msra.mxu0 %v885
    %934 = vmatprep.subr.bf16.mxu0 %v883
    %935 = vmatpush1.bf16.msra.mxu0 %v882
    %936 = vmatprep.subr.bf16.mxu0 %v880
    %937 = vmatpush1.bf16.msra.mxu0 %v879
    %938 = vmatprep.subr.bf16.mxu0 %v877
    %939 = vmatpush1.bf16.msra.mxu0 %v876
    %940 = vmatprep.subr.bf16.mxu0 0
    %941 = vmatpush2.bf16.msra.mxu0 0
    %942 = vmatprep.subr.bf16.mxu0 0
    %943 = vmatpush2.bf16.msra.mxu0 0
    %944 = vmatprep.subr.bf16.mxu0 0
    %945 = vmatpush2.bf16.msra.mxu0 0
    %946 = vmatprep.subr.bf16.mxu0 0
    %947 = vmatpush2.bf16.msra.mxu0 0
    %948 = vmatprep.subr.bf16.mxu0 0
    %949 = vmatpush2.bf16.msra.mxu0 0
    %950 = vmatprep.subr.bf16.mxu0 0
    %951 = vmatpush2.bf16.msra.mxu0 0
    %952 = vmatprep.subr.bf16.mxu0 0
    %953 = vmatpush2.bf16.msra.mxu0 0
    %954 = vmatprep.subr.bf16.mxu0 0
    %955 = vmatpush2.bf16.msra.mxu0 0
    %956 = vmatprep.mubr.bf16.mxu0 0
    %957 = vmatmul.mubr.bf16.gmra.mxu0 %v746
    %v958 = vpop.f32.mrf.mxu0
    %v959 = vadd.f32 %v784, %v958
    %v960 = vpop.f32.mrf.mxu0
    %v961 = vadd.f32 %v788, %v960
    %v962 = vpop.f32.mrf.mxu0
    %v963 = vadd.f32 %v784, %v962
    %v964 = vpop.f32.mrf.mxu0
    %v965 = vadd.f32 %v788, %v964
    %966 = vdwg.mxu0
    %967 = vmatprep.subr.bf16.mxu0 0
    %968 = vmatpush1.bf16.msra.mxu0 %v899
    %969 = vmatprep.subr.bf16.mxu0 0
    %970 = vmatpush1.bf16.msra.mxu0 %v896
    %971 = vmatprep.subr.bf16.mxu0 0
    %972 = vmatpush1.bf16.msra.mxu0 %v893
    %973 = vmatprep.subr.bf16.mxu0 0
    %974 = vmatpush1.bf16.msra.mxu0 %v890
    %975 = vmatprep.subr.bf16.mxu0 0
    %976 = vmatpush1.bf16.msra.mxu0 %v887
    %977 = vmatprep.subr.bf16.mxu0 0
    %978 = vmatpush1.bf16.msra.mxu0 %v884
    %979 = vmatprep.subr.bf16.mxu0 0
    %980 = vmatpush1.bf16.msra.mxu0 %v881
    %981 = vmatprep.subr.bf16.mxu0 0
    %982 = vmatpush1.bf16.msra.mxu0 %v878
    %983 = vmatprep.subr.bf16.mxu0 0
    %984 = vmatpush2.bf16.msra.mxu0 0
    %985 = vmatprep.subr.bf16.mxu0 0
    %986 = vmatpush2.bf16.msra.mxu0 0
    %987 = vmatprep.subr.bf16.mxu0 0
    %988 = vmatpush2.bf16.msra.mxu0 0
    %989 = vmatprep.subr.bf16.mxu0 0
    %990 = vmatpush2.bf16.msra.mxu0 0
    %991 = vmatprep.subr.bf16.mxu0 0
    %992 = vmatpush2.bf16.msra.mxu0 0
    %993 = vmatprep.subr.bf16.mxu0 0
    %994 = vmatpush2.bf16.msra.mxu0 0
    %995 = vmatprep.subr.bf16.mxu0 0
    %996 = vmatpush2.bf16.msra.mxu0 0
    %997 = vmatprep.subr.bf16.mxu0 0
    %998 = vmatpush2.bf16.msra.mxu0 0
    %999 = vmatprep.mubr.bf16.mxu0 0
    %1000 = vmatmul.mubr.bf16.gmra.mxu0 %v746
    %v1001 = vpop.f32.mrf.mxu0
    %v1002 = vadd.f32 %v792, %v1001
    %v1003 = vpop.f32.mrf.mxu0
    %v1004 = vpop.f32.mrf.mxu0
    %v1005 = vadd.f32 %v792, %v1004
    %v1006 = vpop.f32.mrf.mxu0
    %1007 = vdwg.mxu0
    %v1008 = vmax.f32 %v959, 0.0
    %v1009 = vmax.f32 %v961, 0.0
    %v1010 = vmax.f32 %v1002, 0.0
    %v1011 = vmax.f32 %v963, 0.0
    %v1012 = vmax.f32 %v965, 0.0
    %v1013 = vmax.f32 %v1005, 0.0
    %v1014 = vpack.c.bf16 %v1011, %v1008
    %v1015 = vpack.c.bf16 %v1012, %v1009
    %v1018 = vcombine.low %v1014, %v1015
    %v1019 = vcombine.high %v1014, %v1015
    %v1021 = vunpack.c.l.s4 1966171168
    %v1022 = vunpack.c.0.s8 %v1021
    %v1023 = vlaneseq
    %v1024 = vshrl.u32 %v1023, 7
    %v1025 = vsub.s32 %v1022, %v1024
    %v1026 = vrot.slane %v1018, %v1025
    %v1028 = vunpack.c.l.s4 1966171168
    %v1029 = vunpack.c.0.s8 %v1028
    %v1030 = vlaneseq
    %v1031 = vshrl.u32 %v1030, 7
    %v1032 = vsub.s32 %v1029, %v1031
    %v1033 = vrot.slane %v1019, %v1032
    %v1034 = vcombine.high %v1026, %v1026
    %v1035 = vcombine.high %v1033, %v1033
    %v1037 = vunpack.c.l.s4 1966171168
    %v1038 = vunpack.c.0.s8 %v1037
    %v1039 = vlaneseq
    %v1040 = vshrl.u32 %v1039, 7
    %v1041 = vsub.s32 %v1038, %v1040
    %v1042 = vrot.slane %v1026, %v1041
    %v1044 = vunpack.c.l.s4 1966171168
    %v1045 = vunpack.c.0.s8 %v1044
    %v1046 = vlaneseq
    %v1047 = vshrl.u32 %v1046, 7
    %v1048 = vsub.s32 %v1045, %v1047
    %v1049 = vrot.slane %v1033, %v1048
    %v1051 = vunpack.c.l.s4 1966171168
    %v1052 = vunpack.c.0.s8 %v1051
    %v1053 = vlaneseq
    %v1054 = vshrl.u32 %v1053, 7
    %v1055 = vsub.s32 %v1052, %v1054
    %v1056 = vrot.slane %v1034, %v1055
    %v1058 = vunpack.c.l.s4 1966171168
    %v1059 = vunpack.c.0.s8 %v1058
    %v1060 = vlaneseq
    %v1061 = vshrl.u32 %v1060, 7
    %v1062 = vsub.s32 %v1059, %v1061
    %v1063 = vrot.slane %v1035, %v1062
    %v1064 = vcombine.high %v1042, %v1042
    %v1065 = vcombine.high %v1049, %v1049
    %v1066 = vcombine.high %v1056, %v1056
    %v1067 = vcombine.high %v1063, %v1063
    %1076 = vst [vmem:[#allocation13] sm:$0x3] %v1042
    %1077 = vst [vmem:[#allocation13 + $0x2] sm:$0x3] %v1056
    %1078 = vst [vmem:[#allocation13 + $0x4] sm:$0x3] %v1064
    %1079 = vst [vmem:[#allocation13 + $0x6] sm:$0x3] %v1066
    %1080 = vst [vmem:[#allocation13 + $0x8] sm:$0x3] %v1049
    %1081 = vst [vmem:[#allocation13 + $0xa] sm:$0x3] %v1063
    %1082 = vst [vmem:[#allocation13 + $0xc] sm:$0x3] %v1065
    %1083 = vst [vmem:[#allocation13 + $0xe] sm:$0x3] %v1067
    %v1084 = vpack.c.bf16 %v1013, %v1010
    %v1086 = vcombine.high %v1084, %v1084
    %v1088 = vunpack.c.l.s4 1966171168
    %v1089 = vunpack.c.0.s8 %v1088
    %v1090 = vlaneseq
    %v1091 = vshrl.u32 %v1090, 7
    %v1092 = vsub.s32 %v1089, %v1091
    %v1093 = vrot.slane %v1084, %v1092
    %v1095 = vunpack.c.l.s4 1966171168
    %v1096 = vunpack.c.0.s8 %v1095
    %v1097 = vlaneseq
    %v1098 = vshrl.u32 %v1097, 7
    %v1099 = vsub.s32 %v1096, %v1098
    %v1100 = vrot.slane %v1086, %v1099
    %v1101 = vcombine.high %v1093, %v1093
    %v1102 = vcombine.high %v1100, %v1100
    %v1104 = vunpack.c.l.s4 1966171168
    %v1105 = vunpack.c.0.s8 %v1104
    %v1106 = vlaneseq
    %v1107 = vshrl.u32 %v1106, 7
    %v1108 = vsub.s32 %v1105, %v1107
    %v1109 = vrot.slane %v1093, %v1108
    %v1111 = vunpack.c.l.s4 1966171168
    %v1112 = vunpack.c.0.s8 %v1111
    %v1113 = vlaneseq
    %v1114 = vshrl.u32 %v1113, 7
    %v1115 = vsub.s32 %v1112, %v1114
    %v1116 = vrot.slane %v1100, %v1115
    %v1118 = vunpack.c.l.s4 1966171168
    %v1119 = vunpack.c.0.s8 %v1118
    %v1120 = vlaneseq
    %v1121 = vshrl.u32 %v1120, 7
    %v1122 = vsub.s32 %v1119, %v1121
    %v1123 = vrot.slane %v1101, %v1122
    %v1125 = vunpack.c.l.s4 1966171168
    %v1126 = vunpack.c.0.s8 %v1125
    %v1127 = vlaneseq
    %v1128 = vshrl.u32 %v1127, 7
    %v1129 = vsub.s32 %v1126, %v1128
    %v1130 = vrot.slane %v1102, %v1129
    %v1131 = vcombine.high %v1109, %v1109
    %v1132 = vcombine.high %v1116, %v1116
    %v1133 = vcombine.high %v1123, %v1123
    %v1134 = vcombine.high %v1130, %v1130
    %1143 = vst [vmem:[#allocation14] sm:$0x1] %v1109
    %1144 = vst [vmem:[#allocation14 + $0x1] sm:$0x1] %v1123
    %1145 = vst [vmem:[#allocation14 + $0x2] sm:$0x1] %v1131
    %1146 = vst [vmem:[#allocation14 + $0x3] sm:$0x1] %v1133
    %1147 = vst [vmem:[#allocation14 + $0x4] sm:$0x1] %v1116
    %1148 = vst [vmem:[#allocation14 + $0x5] sm:$0x1] %v1130
    %1149 = vst [vmem:[#allocation14 + $0x6] sm:$0x1] %v1132
    %1150 = vst [vmem:[#allocation14 + $0x7] sm:$0x1] %v1134
    // Predicated region
    $region70: #{autoencoder_forward.1} parent=1 // pred_check
      _
    $region71: #{autoencoder_forward.1} parent=1 // pred_check_branch
      %1152 = sbr.rel (0) target = $region73
    $region72: #{autoencoder_forward.1} parent=1 // pred_region
      %s1154 = ssub.s32 256, 32
      %1155 = vsyncadd [#allocation4], %s1154
      %s1156 = sshll.u32 [#allocation13], 4
      %s1157 = int_to_ptr.vmem [resolvable:$true] %s1156
      %1162 = dma.vmem_to_hbm [thread:$0]  %s1157, 32, %s11, [#allocation4], 32, 32, 2
    $region73: #{autoencoder_forward.1} parent=1 // pred_fallthru
      _
    // Predicated region
    $region74: #{autoencoder_forward.1} parent=1 // pred_check
      _
    $region75: #{autoencoder_forward.1} parent=1 // pred_check_branch
      %1164 = sbr.rel (0) target = $region77
    $region76: #{autoencoder_forward.1} parent=1 // pred_region
      %s1166 = ssub.s32 128, 16
      %1167 = vsyncadd [#allocation15], %s1166
      %s1168 = sshll.u32 [#allocation14], 4
      %s1169 = int_to_ptr.vmem [resolvable:$true] %s1168
      %1174 = dma.vmem_to_hbm [thread:$0]  %s1169, 16, %s12, [#allocation15], 16, 16, 1
    $region77: #{autoencoder_forward.1} parent=1 // pred_fallthru
      _
    // Predicated region
    $region78: #{autoencoder_forward.1} parent=1 // pred_check
      _
    $region79: #{autoencoder_forward.1} parent=1 // pred_check_branch
      %1176 = sbr.rel (0) target = $region81
    $region80: #{autoencoder_forward.1} parent=1 // pred_region
      %1177 = dma.done [#allocation4], 256
    $region81: #{autoencoder_forward.1} parent=1 // pred_fallthru
      _
    // Predicated region
    $region82: #{autoencoder_forward.1} parent=1 // pred_check
      _
    $region83: #{autoencoder_forward.1} parent=1 // pred_check_branch
      %1179 = sbr.rel (0) target = $region85
    $region84: #{autoencoder_forward.1} parent=1 // pred_region
      %1180 = dma.done [#allocation15], 128
    $region85: #{autoencoder_forward.1} parent=1 // pred_fallthru
      _
    %1181 = vsyncpa [#allocation3], 1
    %1182 = vsyncpa [#allocation6], 1
    %1183 = vsyncpa [#allocation9], 1
    %1184 = vsyncpa [#allocation12], 1
    %1185 = vsyncpa [#allocation4], 1
    %1186 = vsyncpa [#allocation15], 1

</llo_original>
